<compile_context>
chip_gen: v5e
topology: v5e:2x2
jax: 0.10.0
libtpu: 0.0.40
codegen_flags: <defaults>
</compile_context>

<pallas_src>
import functools

import jax
import jax.numpy as jnp
from jax.experimental import pallas as pl
from jax.experimental.pallas import tpu as pltpu

# ------------------------- hyper-params (args.*) ----------------------------
MAX_ACTION = 1.0        # args.high_action
MIN_LOG_STD = -20.0     # args.min_log_std
MAX_LOG_STD = 2.0       # args.max_log_std
_LOG_SQRT_2PI = 0.9189385332046727  # log(sqrt(2*pi))


def _round_up(n, m):
    return ((n + m - 1) // m) * m


# ------------------------------- kernel -------------------------------------
def actor_kernel(x_ref, w1_ref, w2_ref, w3_ref, wh_ref,
                 b1_ref, b2_ref, b3_ref, bh_ref, eps_ref,
                 out_ref, *, act, head_pad):
    """One batch tile of the actor forward pass."""

    def dot(a, w_ref):
        # Weights are pre-cast at param-prep time (f32 or bf16). Activations are
        # cast to the weight dtype per step (no-op on the f32 path); accumulation
        # and all elementwise math stay f32 (v5e VPU/EUP have no bf16).
        w = w_ref[...]
        return jnp.dot(a.astype(w.dtype), w, preferred_element_type=jnp.float32)

    x = x_ref[...]

    # feature trunk: Linear -> ReLU  x3
    h = jnp.maximum(dot(x, w1_ref) + b1_ref[...], 0.0)
    h = jnp.maximum(dot(h, w2_ref) + b2_ref[...], 0.0)
    h = jnp.maximum(dot(h, w3_ref) + b3_ref[...], 0.0)

    # fused, lane-aligned heads: columns [0:A] = mu, [head_pad:head_pad+A] = log_std
    heads = dot(h, wh_ref) + bh_ref[...]                     # (TB, 2*head_pad)
    mu = heads[:, 0:act]
    log_std = jnp.clip(heads[:, head_pad:head_pad + act], MIN_LOG_STD, MAX_LOG_STD)
    std = jnp.exp(log_std)

    # rsample: z = mu + std * eps
    eps = eps_ref[...]
    z = mu + std * eps

    # evaluate=False path: action = tanh(z)
    action = jnp.tanh(z)

    # Normal(mu, std).log_prob(z) = -0.5*((z-mu)/std)^2 - log(std) - log(sqrt(2*pi)),
    # with (z - mu)/std == eps, plus the tanh correction from the module.
    lp = (-0.5 * eps * eps - log_std - _LOG_SQRT_2PI
          - jnp.log(1.0 - action * action + 1e-07))
    logp = jnp.sum(lp, axis=-1, keepdims=True)               # (TB, 1)

    # direct slice stores (no in-kernel concatenate / temp slab)
    out_ref[:, 0:act] = MAX_ACTION * action
    out_ref[:, act:act + 1] = logp


# ----------------------- one-time parameter preparation ----------------------
def prepare_actor_params(params, use_bf16=False):
    """Hoists operand packing + optional bf16 weight cast out of the call path.

    Returns (w1, w2, w3, wh, b1, b2, b3, bh) where wh/bh are the lane-aligned
    fused heads:  wh[:, 0:A] = W_mu, wh[:, P:P+A] = W_log_std with P = 128-aligned.
    """
    (w1, b1, w2, b2, w3, b3, wmu, bmu, wls, bls) = params
    h2, a = wmu.shape
    p = _round_up(max(a, 1), 128)                            # lane-aligned head offset

    wh = jnp.zeros((h2, 2 * p), dtype=jnp.float32)
    wh = wh.at[:, 0:a].set(wmu).at[:, p:p + a].set(wls)
    bh = jnp.zeros((1, 2 * p), dtype=jnp.float32)
    bh = bh.at[:, 0:a].set(bmu).at[:, p:p + a].set(bls)

    wdt = jnp.bfloat16 if use_bf16 else jnp.float32
    return (w1.astype(wdt), w2.astype(wdt), w3.astype(wdt), wh.astype(wdt),
            b1, b2, b3, bh)


def _pick_tb(batch, tb_max):
    """Batch tile: big enough to hide per-step overhead, but >=2 grid steps for
    large batches so both TensorCores get work on v7x."""
    if batch <= 16:
        return batch
    tb = min(_round_up(tb_max, 8), _round_up(pl.cdiv(batch, 2), 8))
    return min(tb, batch)


def _vmem_limit_bytes(tb, obs, h1, h2, act, head_pad):
    """Conservative static VMEM estimate (double-buffered tiles + lane-padded
    f32 intermediates), clamped to stay inside v7x's 64 MiB physical VMEM."""
    lane = lambda n: _round_up(n, 128)
    f32 = 4
    io = 2 * tb * (lane(obs) + lane(act) + lane(act + 1)) * f32
    wts = 2 * (obs * lane(h1) + h1 * lane(h2) + h2 * lane(h2) + h2 * lane(2 * head_pad)
               + lane(h1) + 2 * lane(h2) + lane(2 * head_pad)) * f32
    live = tb * (3 * lane(h2) + lane(2 * head_pad) + 5 * lane(act)) * f32
    est = io + wts + live
    return int(min(max(2 * est, 16 << 20), 48 << 20))


# ------------------------------- wrapper -------------------------------------
@functools.partial(jax.jit, static_argnames=("tb_max",))
def actor_forward(x, prepped, eps, tb_max=2048):
    (w1, w2, w3, wh, b1, b2, b3, bh) = prepped
    B, OBS = x.shape
    H1 = w1.shape[1]
    H2 = w2.shape[1]
    A = eps.shape[1]
    P = wh.shape[1] // 2                                     # lane-aligned head offset

    TB = _pick_tb(B, tb_max)
    grid = (pl.cdiv(B, TB),)

    kernel = functools.partial(actor_kernel, act=A, head_pad=P)

    out = pl.pallas_call(
        kernel,
        out_shape=jax.ShapeDtypeStruct((B, A + 1), jnp.float32),
        grid_spec=pltpu.PrefetchScalarGridSpec(
            num_scalar_prefetch=0,
            grid=grid,
            in_specs=[
                pl.BlockSpec((TB, OBS), lambda i: (i, 0)),       # x (pipelined)
                pl.BlockSpec((OBS, H1), lambda i: (0, 0)),       # w1 (resident)
                pl.BlockSpec((H1, H2), lambda i: (0, 0)),        # w2
                pl.BlockSpec((H2, H2), lambda i: (0, 0)),        # w3
                pl.BlockSpec((H2, 2 * P), lambda i: (0, 0)),     # fused heads
                pl.BlockSpec((1, H1), lambda i: (0, 0)),         # b1
                pl.BlockSpec((1, H2), lambda i: (0, 0)),         # b2
                pl.BlockSpec((1, H2), lambda i: (0, 0)),         # b3
                pl.BlockSpec((1, 2 * P), lambda i: (0, 0)),      # head biases
                pl.BlockSpec((TB, A), lambda i: (i, 0)),         # eps (pipelined)
            ],
            out_specs=pl.BlockSpec((TB, A + 1), lambda i: (i, 0)),
        ),
        compiler_params=pltpu.CompilerParams(
            dimension_semantics=("parallel",),
            vmem_limit_bytes=_vmem_limit_bytes(TB, OBS, H1, H2, A, P)),
    )(x, w1, w2, w3, wh, b1, b2, b3, bh, eps)

    actions = out[:, :A]
    log_prob = out[:, A:A + 1]
    return actions, log_prob


# ------------------------- deterministic parameter init ----------------------
def make_params(key, obs_dim, h1, h2, act_dim):
    """Orthogonal weights (std=1.0), constant bias 1e-6 — matches module init."""
    ortho = jax.nn.initializers.orthogonal(scale=1.0)
    ks = jax.random.split(key, 5)
    bias_const = 1e-06

    def lin(k, d_in, d_out):
        # stored as (in, out) == PyTorch weight.T, so y = x @ W + b
        w = ortho(k, (d_in, d_out), jnp.float32)
        b = jnp.full((1, d_out), bias_const, dtype=jnp.float32)
        return w, b

    w1, b1 = lin(ks[0], obs_dim, h1)
    w2, b2 = lin(ks[1], h1, h2)
    w3, b3 = lin(ks[2], h2, h2)
    wmu, bmu = lin(ks[3], h2, act_dim)
    wls, bls = lin(ks[4], h2, act_dim)
    return (w1, b1, w2, b2, w3, b3, wmu, bmu, wls, bls)


# --------------------------- pure-JAX reference -------------------------------
def reference(x, params, eps):
    (w1, b1, w2, b2, w3, b3, wmu, bmu, wls, bls) = params
    h = jax.nn.relu(x @ w1 + b1)
    h = jax.nn.relu(h @ w2 + b2)
    h = jax.nn.relu(h @ w3 + b3)
    mu = h @ wmu + bmu
    log_std = jnp.clip(h @ wls + bls, MIN_LOG_STD, MAX_LOG_STD)
    std = jnp.exp(log_std)
    z = mu + std * eps
    a = jnp.tanh(z)
    lp = (-0.5 * ((z - mu) / std) ** 2 - log_std - _LOG_SQRT_2PI
          - jnp.log(1.0 - a * a + 1e-07))
    return MAX_ACTION * a, jnp.sum(lp, axis=-1, keepdims=True)


# -------------------------------- main ---------------------------------------
if __name__ == "__main__":
    # small shapes consistent with the module
    OBS, H1, H2, ACT = 16, 32, 32, 8

    key = jax.random.PRNGKey(0)
    k_p, k_rest = jax.random.split(key)
    params = make_params(k_p, OBS, H1, H2, ACT)
    prepped = prepare_actor_params(params, use_bf16=False)   # one-time prep

    ok = True
    # B=8  : single-tile path;  B=52 : multi-step grid with a ragged last tile
    for B in (8, 52):
        k_rest, k_x, k_e = jax.random.split(k_rest, 3)
        x = jax.random.normal(k_x, (B, OBS), dtype=jnp.float32)
        eps = jax.random.normal(k_e, (B, ACT), dtype=jnp.float32)

        actions, log_prob = actor_forward(x, prepped, eps)
        jax.block_until_ready((actions, log_prob))

        assert actions.shape == (B, ACT) and log_prob.shape == (B, 1)
        assert jnp.all(jnp.isfinite(actions)) and jnp.all(jnp.isfinite(log_prob))

        ra, rlp = reference(x, params, eps)
        ok &= bool(jnp.allclose(actions, ra, atol=1e-4, rtol=1e-4))
        ok &= bool(jnp.allclose(log_prob, rlp, atol=1e-3, rtol=1e-4))

    assert ok
    print("KERNEL_OK")
</pallas_src>

<mosaic_0001>
module attributes {stable_mosaic.version = 11 : i64} {
  func.func @actor_kernel(%arg0: i32, %arg1: memref<8x16xf32, #tpu.memory_space<vmem>>, %arg2: memref<16x32xf32, #tpu.memory_space<vmem>>, %arg3: memref<32x32xf32, #tpu.memory_space<vmem>>, %arg4: memref<32x32xf32, #tpu.memory_space<vmem>>, %arg5: memref<32x256xf32, #tpu.memory_space<vmem>>, %arg6: memref<1x32xf32, #tpu.memory_space<vmem>>, %arg7: memref<1x32xf32, #tpu.memory_space<vmem>>, %arg8: memref<1x32xf32, #tpu.memory_space<vmem>>, %arg9: memref<1x256xf32, #tpu.memory_space<vmem>>, %arg10: memref<8x8xf32, #tpu.memory_space<vmem>>, %arg11: memref<8x9xf32, #tpu.memory_space<vmem>>) attributes {dimension_semantics = [#tpu.dimension_semantics<parallel>], iteration_bounds = array<i64: 1>, scalar_prefetch = 0 : i64, scratch_operands = 0 : i64, tpu.core_type = #tpu.core_type<tc>, window_params = [{transform_indices = @transform_0, window_bounds = array<i64: 8, 16>}, {pipeline_mode = #tpu.pipeline_mode<synchronous>, transform_indices = @transform_1, window_bounds = array<i64: 16, 32>}, {pipeline_mode = #tpu.pipeline_mode<synchronous>, transform_indices = @transform_2, window_bounds = array<i64: 32, 32>}, {pipeline_mode = #tpu.pipeline_mode<synchronous>, transform_indices = @transform_3, window_bounds = array<i64: 32, 32>}, {pipeline_mode = #tpu.pipeline_mode<synchronous>, transform_indices = @transform_4, window_bounds = array<i64: 32, 256>}, {pipeline_mode = #tpu.pipeline_mode<synchronous>, transform_indices = @transform_5, window_bounds = array<i64: 1, 32>}, {pipeline_mode = #tpu.pipeline_mode<synchronous>, transform_indices = @transform_6, window_bounds = array<i64: 1, 32>}, {pipeline_mode = #tpu.pipeline_mode<synchronous>, transform_indices = @transform_7, window_bounds = array<i64: 1, 32>}, {pipeline_mode = #tpu.pipeline_mode<synchronous>, transform_indices = @transform_8, window_bounds = array<i64: 1, 256>}, {transform_indices = @transform_9, window_bounds = array<i64: 8, 8>}, {transform_indices = @transform_10, window_bounds = array<i64: 8, 9>}]} {
    %c0 = arith.constant 0 : index
    %c0_0 = arith.constant 0 : index
    %0 = vector.load %arg1[%c0, %c0_0] : memref<8x16xf32, #tpu.memory_space<vmem>>, vector<8x16xf32>
    %c0_1 = arith.constant 0 : index
    %c0_2 = arith.constant 0 : index
    %1 = vector.load %arg2[%c0_1, %c0_2] : memref<16x32xf32, #tpu.memory_space<vmem>>, vector<16x32xf32>
    %cst = arith.constant dense<0.000000e+00> : vector<8x32xf32>
    %2 = tpu.matmul %0, %1, %cst {dimension_numbers = #tpu.dot_dimension_numbers<[1], [0], [0], [1], [0, 0, 1, 1], [], []>} : vector<8x16xf32>, vector<16x32xf32>, vector<8x32xf32> -> vector<8x32xf32>
    %c0_3 = arith.constant 0 : index
    %c0_4 = arith.constant 0 : index
    %3 = vector.load %arg6[%c0_3, %c0_4] : memref<1x32xf32, #tpu.memory_space<vmem>>, vector<1x32xf32>
    %4 = vector.broadcast %3 : vector<1x32xf32> to vector<8x32xf32>
    %5 = arith.addf %2, %4 : vector<8x32xf32>
    %cst_5 = arith.constant 0.000000e+00 : f32
    %6 = vector.broadcast %cst_5 : f32 to vector<8x32xf32>
    %7 = arith.maximumf %5, %6 : vector<8x32xf32>
    %c0_6 = arith.constant 0 : index
    %c0_7 = arith.constant 0 : index
    %8 = vector.load %arg3[%c0_6, %c0_7] : memref<32x32xf32, #tpu.memory_space<vmem>>, vector<32x32xf32>
    %cst_8 = arith.constant dense<0.000000e+00> : vector<8x32xf32>
    %9 = tpu.matmul %7, %8, %cst_8 {dimension_numbers = #tpu.dot_dimension_numbers<[1], [0], [0], [1], [0, 0, 1, 1], [], []>} : vector<8x32xf32>, vector<32x32xf32>, vector<8x32xf32> -> vector<8x32xf32>
    %c0_9 = arith.constant 0 : index
    %c0_10 = arith.constant 0 : index
    %10 = vector.load %arg7[%c0_9, %c0_10] : memref<1x32xf32, #tpu.memory_space<vmem>>, vector<1x32xf32>
    %11 = vector.broadcast %10 : vector<1x32xf32> to vector<8x32xf32>
    %12 = arith.addf %9, %11 : vector<8x32xf32>
    %cst_11 = arith.constant 0.000000e+00 : f32
    %13 = vector.broadcast %cst_11 : f32 to vector<8x32xf32>
    %14 = arith.maximumf %12, %13 : vector<8x32xf32>
    %c0_12 = arith.constant 0 : index
    %c0_13 = arith.constant 0 : index
    %15 = vector.load %arg4[%c0_12, %c0_13] : memref<32x32xf32, #tpu.memory_space<vmem>>, vector<32x32xf32>
    %cst_14 = arith.constant dense<0.000000e+00> : vector<8x32xf32>
    %16 = tpu.matmul %14, %15, %cst_14 {dimension_numbers = #tpu.dot_dimension_numbers<[1], [0], [0], [1], [0, 0, 1, 1], [], []>} : vector<8x32xf32>, vector<32x32xf32>, vector<8x32xf32> -> vector<8x32xf32>
    %c0_15 = arith.constant 0 : index
    %c0_16 = arith.constant 0 : index
    %17 = vector.load %arg8[%c0_15, %c0_16] : memref<1x32xf32, #tpu.memory_space<vmem>>, vector<1x32xf32>
    %18 = vector.broadcast %17 : vector<1x32xf32> to vector<8x32xf32>
    %19 = arith.addf %16, %18 : vector<8x32xf32>
    %cst_17 = arith.constant 0.000000e+00 : f32
    %20 = vector.broadcast %cst_17 : f32 to vector<8x32xf32>
    %21 = arith.maximumf %19, %20 : vector<8x32xf32>
    %c0_18 = arith.constant 0 : index
    %c0_19 = arith.constant 0 : index
    %22 = vector.load %arg5[%c0_18, %c0_19] : memref<32x256xf32, #tpu.memory_space<vmem>>, vector<32x256xf32>
    %cst_20 = arith.constant dense<0.000000e+00> : vector<8x256xf32>
    %23 = tpu.matmul %21, %22, %cst_20 {dimension_numbers = #tpu.dot_dimension_numbers<[1], [0], [0], [1], [0, 0, 1, 1], [], []>} : vector<8x32xf32>, vector<32x256xf32>, vector<8x256xf32> -> vector<8x256xf32>
    %c0_21 = arith.constant 0 : index
    %c0_22 = arith.constant 0 : index
    %24 = vector.load %arg9[%c0_21, %c0_22] : memref<1x256xf32, #tpu.memory_space<vmem>>, vector<1x256xf32>
    %25 = vector.broadcast %24 : vector<1x256xf32> to vector<8x256xf32>
    %26 = arith.addf %23, %25 : vector<8x256xf32>
    %27 = vector.extract_strided_slice %26 {offsets = [0, 0], sizes = [8, 8], strides = [1, 1]} : vector<8x256xf32> to vector<8x8xf32>
    %28 = vector.extract_strided_slice %26 {offsets = [0, 128], sizes = [8, 8], strides = [1, 1]} : vector<8x256xf32> to vector<8x8xf32>
    %cst_23 = arith.constant -2.000000e+01 : f32
    %cst_24 = arith.constant 2.000000e+00 : f32
    %29 = vector.broadcast %cst_23 : f32 to vector<8x8xf32>
    %30 = arith.maximumf %29, %28 : vector<8x8xf32>
    %31 = vector.broadcast %cst_24 : f32 to vector<8x8xf32>
    %32 = arith.minimumf %31, %30 : vector<8x8xf32>
    %33 = math.exp %32 : vector<8x8xf32>
    %c0_25 = arith.constant 0 : index
    %c0_26 = arith.constant 0 : index
    %34 = vector.load %arg10[%c0_25, %c0_26] : memref<8x8xf32, #tpu.memory_space<vmem>>, vector<8x8xf32>
    %35 = arith.mulf %33, %34 : vector<8x8xf32>
    %36 = arith.addf %27, %35 : vector<8x8xf32>
    %37 = math.tanh %36 : vector<8x8xf32>
    %cst_27 = arith.constant -5.000000e-01 : f32
    %38 = vector.broadcast %cst_27 : f32 to vector<8x8xf32>
    %39 = arith.mulf %38, %34 : vector<8x8xf32>
    %40 = arith.mulf %39, %34 : vector<8x8xf32>
    %41 = arith.subf %40, %32 : vector<8x8xf32>
    %cst_28 = arith.constant 0.918938517 : f32
    %42 = vector.broadcast %cst_28 : f32 to vector<8x8xf32>
    %43 = arith.subf %41, %42 : vector<8x8xf32>
    %44 = arith.mulf %37, %37 : vector<8x8xf32>
    %cst_29 = arith.constant 1.000000e+00 : f32
    %45 = vector.broadcast %cst_29 : f32 to vector<8x8xf32>
    %46 = arith.subf %45, %44 : vector<8x8xf32>
    %cst_30 = arith.constant 1.000000e-07 : f32
    %47 = vector.broadcast %cst_30 : f32 to vector<8x8xf32>
    %48 = arith.addf %46, %47 : vector<8x8xf32>
    %49 = math.log %48 : vector<8x8xf32>
    %50 = arith.subf %43, %49 : vector<8x8xf32>
    %cst_31 = arith.constant dense<0.000000e+00> : vector<8xf32>
    %51 = vector.multi_reduction <add>, %50, %cst_31 [1] : vector<8x8xf32> to vector<8xf32>
    %52 = vector.shape_cast %51 : vector<8xf32> to vector<8x1xf32>
    %cst_32 = arith.constant 1.000000e+00 : f32
    %53 = vector.broadcast %cst_32 : f32 to vector<8x8xf32>
    %54 = arith.mulf %53, %37 : vector<8x8xf32>
    %c0_33 = arith.constant 0 : index
    %c0_34 = arith.constant 0 : index
    %55 = vector.load %arg11[%c0_33, %c0_34] : memref<8x9xf32, #tpu.memory_space<vmem>>, vector<8x8xf32>
    tpu.vector_store %arg11[%c0_33, %c0_34], %54 {strides = array<i32>} : memref<8x9xf32, #tpu.memory_space<vmem>>, vector<8x8xf32>,
    %c0_35 = arith.constant 0 : index
    %c8 = arith.constant 8 : index
    %56 = vector.load %arg11[%c0_35, %c8] : memref<8x9xf32, #tpu.memory_space<vmem>>, vector<8x1xf32>
    tpu.vector_store %arg11[%c0_35, %c8], %52 {strides = array<i32>} : memref<8x9xf32, #tpu.memory_space<vmem>>, vector<8x1xf32>,
    return
  }
  func.func @transform_0(%arg0: i32) -> (i32, i32) {
    %c0_i32 = arith.constant 0 : i32
    %c0_i32_0 = arith.constant 0 : i32
    return %arg0, %c0_i32 : i32, i32
  }
  func.func @transform_1(%arg0: i32) -> (i32, i32) {
    %c0_i32 = arith.constant 0 : i32
    %c0_i32_0 = arith.constant 0 : i32
    %c0_i32_1 = arith.constant 0 : i32
    return %c0_i32, %c0_i32_0 : i32, i32
  }
  func.func @transform_2(%arg0: i32) -> (i32, i32) {
    %c0_i32 = arith.constant 0 : i32
    %c0_i32_0 = arith.constant 0 : i32
    %c0_i32_1 = arith.constant 0 : i32
    return %c0_i32, %c0_i32_0 : i32, i32
  }
  func.func @transform_3(%arg0: i32) -> (i32, i32) {
    %c0_i32 = arith.constant 0 : i32
    %c0_i32_0 = arith.constant 0 : i32
    %c0_i32_1 = arith.constant 0 : i32
    return %c0_i32, %c0_i32_0 : i32, i32
  }
  func.func @transform_4(%arg0: i32) -> (i32, i32) {
    %c0_i32 = arith.constant 0 : i32
    %c0_i32_0 = arith.constant 0 : i32
    %c0_i32_1 = arith.constant 0 : i32
    return %c0_i32, %c0_i32_0 : i32, i32
  }
  func.func @transform_5(%arg0: i32) -> (i32, i32) {
    %c0_i32 = arith.constant 0 : i32
    %c0_i32_0 = arith.constant 0 : i32
    %c0_i32_1 = arith.constant 0 : i32
    return %c0_i32, %c0_i32_0 : i32, i32
  }
  func.func @transform_6(%arg0: i32) -> (i32, i32) {
    %c0_i32 = arith.constant 0 : i32
    %c0_i32_0 = arith.constant 0 : i32
    %c0_i32_1 = arith.constant 0 : i32
    return %c0_i32, %c0_i32_0 : i32, i32
  }
  func.func @transform_7(%arg0: i32) -> (i32, i32) {
    %c0_i32 = arith.constant 0 : i32
    %c0_i32_0 = arith.constant 0 : i32
    %c0_i32_1 = arith.constant 0 : i32
    return %c0_i32, %c0_i32_0 : i32, i32
  }
  func.func @transform_8(%arg0: i32) -> (i32, i32) {
    %c0_i32 = arith.constant 0 : i32
    %c0_i32_0 = arith.constant 0 : i32
    %c0_i32_1 = arith.constant 0 : i32
    return %c0_i32, %c0_i32_0 : i32, i32
  }
  func.func @transform_9(%arg0: i32) -> (i32, i32) {
    %c0_i32 = arith.constant 0 : i32
    %c0_i32_0 = arith.constant 0 : i32
    return %arg0, %c0_i32 : i32, i32
  }
  func.func @transform_10(%arg0: i32) -> (i32, i32) {
    %c0_i32 = arith.constant 0 : i32
    %c0_i32_0 = arith.constant 0 : i32
    return %arg0, %c0_i32 : i32, i32
  }
}

</mosaic_0001>

<llo_original>
// kernel: actor_forward.1
$region0: #{actor_forward.1}
  #allocation0 [shape = 'u32[]', space=smem, size = 0x4, offset = 0x4, fixed_abs, tag = 'smem constant byte address 0x4 - core index']
  #allocation1 [shape = 'u32[72,128]{1,0:T(1,128)}', space=vmem, size = 0x9000, scoped, tag = 'internal scratch']
  %s0 = inlined_call_operand.hbm [shape: f32[8,16], index: 0, kind: input, shape index: {}]
  %s1 = inlined_call_operand.hbm [shape: f32[16,32], index: 1, kind: input, shape index: {}]
  %s2 = inlined_call_operand.hbm [shape: f32[32,32], index: 2, kind: input, shape index: {}]
  %s3 = inlined_call_operand.hbm [shape: f32[32,32], index: 3, kind: input, shape index: {}]
  %s4 = inlined_call_operand.hbm [shape: f32[32,256], index: 4, kind: input, shape index: {}]
  %s5 = inlined_call_operand.hbm [shape: f32[1,32], index: 5, kind: input, shape index: {}]
  %s6 = inlined_call_operand.hbm [shape: f32[1,32], index: 6, kind: input, shape index: {}]
  %s7 = inlined_call_operand.hbm [shape: f32[1,32], index: 7, kind: input, shape index: {}]
  %s8 = inlined_call_operand.hbm [shape: f32[1,256], index: 8, kind: input, shape index: {}]
  %s9 = inlined_call_operand.vmem [shape: f32[8,8], index: 9, kind: input, shape index: {}]
  %s10 = inlined_call_operand.vmem [shape: f32[8,9], index: 10, kind: output, shape index: {}]
  %s11 = sld [smem:[#allocation0]]
  $region86: #{actor_forward.1} parent=0
    _
  %s13 = ssub.s32 1, %s11
  %s14 = scalar_select 0, %s13, %s11
  $region1: #{actor_forward.1} parent=0
    #allocation2 [shape = 'u8[4096]{0}', space=vmem, size = 0x1000, scoped, tag = 'input window, operand 0, single buffered']
    #allocation3 [shape = 's32[1]{0}', space=sflag, size = 0x4, scoped, tag = 'scoped memory for actor_forward.1']
    #allocation4 [shape = 'u8[8192]{0}', space=vmem, size = 0x2000, scoped, tag = 'input window, operand 1, single buffered']
    #allocation5 [shape = 's32[1]{0}', space=sflag, size = 0x4, scoped, tag = 'scoped memory for actor_forward.1']
    #allocation6 [shape = 'u8[16384]{0}', space=vmem, size = 0x4000, scoped, tag = 'input window, operand 2, single buffered']
    #allocation7 [shape = 'u8[16384]{0}', space=vmem, size = 0x4000, scoped, tag = 'input window, operand 3, single buffered']
    #allocation8 [shape = 's32[1]{0}', space=sflag, size = 0x4, scoped, tag = 'scoped memory for actor_forward.1']
    #allocation9 [shape = 'u8[32768]{0}', space=vmem, size = 0x8000, scoped, tag = 'input window, operand 4, single buffered']
    #allocation10 [shape = 'u8[512]{0}', space=vmem, size = 0x400, scoped, tag = 'input window, operand 5, single buffered']
    #allocation11 [shape = 's32[1]{0}', space=sflag, size = 0x4, scoped, tag = 'scoped memory for actor_forward.1']
    #allocation12 [shape = 'u8[512]{0}', space=vmem, size = 0x400, scoped, tag = 'input window, operand 6, single buffered']
    #allocation13 [shape = 'u8[512]{0}', space=vmem, size = 0x400, scoped, tag = 'input window, operand 7, single buffered']
    #allocation14 [shape = 's32[1]{0}', space=sflag, size = 0x4, scoped, tag = 'scoped memory for actor_forward.1']
    #allocation15 [shape = 'u8[1024]{0}', space=vmem, size = 0x400, scoped, tag = 'input window, operand 8, single buffered']
    %15 = vsyncpa [#allocation3], 0
    %16 = vsyncpa [#allocation5], 0
    %17 = vsyncpa [#allocation8], 0
    %18 = vsyncpa [#allocation11], 0
    %19 = vsyncpa [#allocation14], 0
    // Predicated region
    $region2: #{actor_forward.1} parent=1 // pred_check
      _
    $region3: #{actor_forward.1} parent=1 // pred_check_branch
      %21 = sbr.rel (0) target = $region5
    $region4: #{actor_forward.1} parent=1 // pred_region
      %23 = vsyncadd [#allocation3], 0
      %s25 = sshll.u32 %s0, 4
      %s26 = int_to_ptr.hbm [resolvable:$true] %s25
      %s27 = sshll.u32 [#allocation2], 4
      %s28 = int_to_ptr.vmem [resolvable:$true] %s27
      %30 = dma.hbm_to_vmem [thread:$0]  %s26, 128, %s28, [#allocation3]
    $region5: #{actor_forward.1} parent=1 // pred_fallthru
      _
    // Predicated region
    $region6: #{actor_forward.1} parent=1 // pred_check
      _
    $region7: #{actor_forward.1} parent=1 // pred_check_branch
      %32 = sbr.rel (0) target = $region9
    $region8: #{actor_forward.1} parent=1 // pred_region
      %34 = vsyncadd [#allocation5], 0
      %s35 = sshll.u32 %s1, 4
      %s36 = int_to_ptr.hbm [resolvable:$true] %s35
      %s37 = sshll.u32 [#allocation4], 4
      %s38 = int_to_ptr.vmem [resolvable:$true] %s37
      %43 = dma.hbm_to_vmem [thread:$0]  %s36, 256, %s38, [#allocation5], 128, 128, 8
    $region9: #{actor_forward.1} parent=1 // pred_fallthru
      _
    // Predicated region
    $region10: #{actor_forward.1} parent=1 // pred_check
      _
    $region11: #{actor_forward.1} parent=1 // pred_check_branch
      %45 = sbr.rel (0) target = $region13
    $region12: #{actor_forward.1} parent=1 // pred_region
      %47 = vsyncadd [#allocation5], 0
      %s48 = sshll.u32 %s2, 4
      %s49 = int_to_ptr.hbm [resolvable:$true] %s48
      %s50 = sshll.u32 [#allocation6], 4
      %s51 = int_to_ptr.vmem [resolvable:$true] %s50
      %56 = dma.hbm_to_vmem [thread:$0]  %s49, 512, %s51, [#allocation5], 128, 128, 8
    $region13: #{actor_forward.1} parent=1 // pred_fallthru
      _
    // Predicated region
    $region14: #{actor_forward.1} parent=1 // pred_check
      _
    $region15: #{actor_forward.1} parent=1 // pred_check_branch
      %58 = sbr.rel (0) target = $region17
    $region16: #{actor_forward.1} parent=1 // pred_region
      %60 = vsyncadd [#allocation8], 0
      %s61 = sshll.u32 %s3, 4
      %s62 = int_to_ptr.hbm [resolvable:$true] %s61
      %s63 = sshll.u32 [#allocation7], 4
      %s64 = int_to_ptr.vmem [resolvable:$true] %s63
      %69 = dma.hbm_to_vmem [thread:$0]  %s62, 512, %s64, [#allocation8], 128, 128, 8
    $region17: #{actor_forward.1} parent=1 // pred_fallthru
      _
    // Predicated region
    $region18: #{actor_forward.1} parent=1 // pred_check
      _
    $region19: #{actor_forward.1} parent=1 // pred_check_branch
      %71 = sbr.rel (0) target = $region21
    $region20: #{actor_forward.1} parent=1 // pred_region
      %73 = vsyncadd [#allocation8], 0
      %s74 = sshll.u32 %s4, 4
      %s75 = int_to_ptr.hbm [resolvable:$true] %s74
      %s76 = sshll.u32 [#allocation9], 4
      %s77 = int_to_ptr.vmem [resolvable:$true] %s76
      %82 = dma.hbm_to_vmem [thread:$0]  %s75, 1024, %s77, [#allocation8], 256, 256, 16
    $region21: #{actor_forward.1} parent=1 // pred_fallthru
      _
    // Predicated region
    $region22: #{actor_forward.1} parent=1 // pred_check
      _
    $region23: #{actor_forward.1} parent=1 // pred_check_branch
      %84 = sbr.rel (0) target = $region25
    $region24: #{actor_forward.1} parent=1 // pred_region
      %86 = vsyncadd [#allocation11], 0
      %s88 = sshll.u32 %s5, 4
      %s89 = int_to_ptr.hbm [resolvable:$true] %s88
      %s90 = sshll.u32 [#allocation10], 4
      %s91 = int_to_ptr.vmem [resolvable:$true] %s90
      %93 = dma.hbm_to_vmem [thread:$0]  %s89, 16, %s91, [#allocation11]
    $region25: #{actor_forward.1} parent=1 // pred_fallthru
      _
    // Predicated region
    $region26: #{actor_forward.1} parent=1 // pred_check
      _
    $region27: #{actor_forward.1} parent=1 // pred_check_branch
      %95 = sbr.rel (0) target = $region29
    $region28: #{actor_forward.1} parent=1 // pred_region
      %97 = vsyncadd [#allocation11], 0
      %s99 = sshll.u32 %s6, 4
      %s100 = int_to_ptr.hbm [resolvable:$true] %s99
      %s101 = sshll.u32 [#allocation12], 4
      %s102 = int_to_ptr.vmem [resolvable:$true] %s101
      %104 = dma.hbm_to_vmem [thread:$0]  %s100, 16, %s102, [#allocation11]
    $region29: #{actor_forward.1} parent=1 // pred_fallthru
      _
    // Predicated region
    $region30: #{actor_forward.1} parent=1 // pred_check
      _
    $region31: #{actor_forward.1} parent=1 // pred_check_branch
      %106 = sbr.rel (0) target = $region33
    $region32: #{actor_forward.1} parent=1 // pred_region
      %108 = vsyncadd [#allocation14], 0
      %s110 = sshll.u32 %s7, 4
      %s111 = int_to_ptr.hbm [resolvable:$true] %s110
      %s112 = sshll.u32 [#allocation13], 4
      %s113 = int_to_ptr.vmem [resolvable:$true] %s112
      %115 = dma.hbm_to_vmem [thread:$0]  %s111, 16, %s113, [#allocation14]
    $region33: #{actor_forward.1} parent=1 // pred_fallthru
      _
    // Predicated region
    $region34: #{actor_forward.1} parent=1 // pred_check
      _
    $region35: #{actor_forward.1} parent=1 // pred_check_branch
      %117 = sbr.rel (0) target = $region37
    $region36: #{actor_forward.1} parent=1 // pred_region
      %119 = vsyncadd [#allocation14], 0
      %s121 = sshll.u32 %s8, 4
      %s122 = int_to_ptr.hbm [resolvable:$true] %s121
      %s123 = sshll.u32 [#allocation15], 4
      %s124 = int_to_ptr.vmem [resolvable:$true] %s123
      %126 = dma.hbm_to_vmem [thread:$0]  %s122, 32, %s124, [#allocation14]
    $region37: #{actor_forward.1} parent=1 // pred_fallthru
      _
    // Predicated region
    $region38: #{actor_forward.1} parent=1 // pred_check
      _
    $region39: #{actor_forward.1} parent=1 // pred_check_branch
      %128 = sbr.rel (0) target = $region41
    $region40: #{actor_forward.1} parent=1 // pred_region
      _
    $region41: #{actor_forward.1} parent=1 // pred_fallthru
      _
    // Predicated region
    $region42: #{actor_forward.1} parent=1 // pred_check
      _
    $region43: #{actor_forward.1} parent=1 // pred_check_branch
      %130 = sbr.rel (0) target = $region45
    $region44: #{actor_forward.1} parent=1 // pred_region
      %132 = dma.done [#allocation3], 128
    $region45: #{actor_forward.1} parent=1 // pred_fallthru
      _
    // Predicated region
    $region46: #{actor_forward.1} parent=1 // pred_check
      _
    $region47: #{actor_forward.1} parent=1 // pred_check_branch
      %134 = sbr.rel (0) target = $region49
    $region48: #{actor_forward.1} parent=1 // pred_region
      %136 = dma.done [#allocation5], 256
    $region49: #{actor_forward.1} parent=1 // pred_fallthru
      _
    // Predicated region
    $region50: #{actor_forward.1} parent=1 // pred_check
      _
    $region51: #{actor_forward.1} parent=1 // pred_check_branch
      %138 = sbr.rel (0) target = $region53
    $region52: #{actor_forward.1} parent=1 // pred_region
      %140 = dma.done [#allocation5], 512
    $region53: #{actor_forward.1} parent=1 // pred_fallthru
      _
    // Predicated region
    $region54: #{actor_forward.1} parent=1 // pred_check
      _
    $region55: #{actor_forward.1} parent=1 // pred_check_branch
      %142 = sbr.rel (0) target = $region57
    $region56: #{actor_forward.1} parent=1 // pred_region
      %144 = dma.done [#allocation8], 512
    $region57: #{actor_forward.1} parent=1 // pred_fallthru
      _
    // Predicated region
    $region58: #{actor_forward.1} parent=1 // pred_check
      _
    $region59: #{actor_forward.1} parent=1 // pred_check_branch
      %146 = sbr.rel (0) target = $region61
    $region60: #{actor_forward.1} parent=1 // pred_region
      %148 = dma.done [#allocation8], 1024
    $region61: #{actor_forward.1} parent=1 // pred_fallthru
      _
    // Predicated region
    $region62: #{actor_forward.1} parent=1 // pred_check
      _
    $region63: #{actor_forward.1} parent=1 // pred_check_branch
      %150 = sbr.rel (0) target = $region65
    $region64: #{actor_forward.1} parent=1 // pred_region
      %152 = dma.done [#allocation11], 16
    $region65: #{actor_forward.1} parent=1 // pred_fallthru
      _
    // Predicated region
    $region66: #{actor_forward.1} parent=1 // pred_check
      _
    $region67: #{actor_forward.1} parent=1 // pred_check_branch
      %154 = sbr.rel (0) target = $region69
    $region68: #{actor_forward.1} parent=1 // pred_region
      %156 = dma.done [#allocation11], 16
    $region69: #{actor_forward.1} parent=1 // pred_fallthru
      _
    // Predicated region
    $region70: #{actor_forward.1} parent=1 // pred_check
      _
    $region71: #{actor_forward.1} parent=1 // pred_check_branch
      %158 = sbr.rel (0) target = $region73
    $region72: #{actor_forward.1} parent=1 // pred_region
      %160 = dma.done [#allocation14], 16
    $region73: #{actor_forward.1} parent=1 // pred_fallthru
      _
    // Predicated region
    $region74: #{actor_forward.1} parent=1 // pred_check
      _
    $region75: #{actor_forward.1} parent=1 // pred_check_branch
      %162 = sbr.rel (0) target = $region77
    $region76: #{actor_forward.1} parent=1 // pred_region
      %164 = dma.done [#allocation14], 32
    $region77: #{actor_forward.1} parent=1 // pred_fallthru
      _
    %v165 = vld [vmem:[#allocation2] sm:$0xff]
    %v166 = vld [vmem:[#allocation4] sm:$0xff]
    %v167 = vld [vmem:[#allocation4 + $0x8] sm:$0xff]
    %v168 = vld [vmem:[#allocation10] sm:$0x1]
    %v170 = vperm.slane %v168, 0
    %vm172 = vcmask 130048
    %v174 = vsel %vm172, %v165, 0
    %176 = vmatpush.msra.mxu0 0.0
    %177 = vmatpush.msra.mxu0 0.0
    %178 = vmatpush.msra.mxu0 0.0
    %179 = vmatpush.msra.mxu0 0.0
    %180 = vmatpush.msra.mxu0 0.0
    %181 = vmatpush.msra.mxu0 0.0
    %182 = vmatpush.msra.mxu0 0.0
    %183 = vmatpush.msra.mxu0 0.0
    %184 = vmatpush.msra.mxu0 0.0
    %185 = vmatpush.msra.mxu0 0.0
    %186 = vmatpush.msra.mxu0 0.0
    %187 = vmatpush.msra.mxu0 0.0
    %188 = vmatpush.msra.mxu0 0.0
    %189 = vmatpush.msra.mxu0 0.0
    %190 = vmatpush.msra.mxu0 %v167
    %191 = vmatpush.msra.mxu0 %v166
    %192 = vmatmul.f32.gmra.mxu0 %v174
    %v193 = vpop.f32.mrf.mxu0
    %v194 = vadd.f32 %v170, %v193
    %195 = vdwg.mxu0
    %v196 = vmax.f32 %v194, 0.0
    %v197 = vld [vmem:[#allocation6] sm:$0xff]
    %v198 = vld [vmem:[#allocation6 + $0x8] sm:$0xff]
    %v199 = vld [vmem:[#allocation6 + $0x10] sm:$0xff]
    %v200 = vld [vmem:[#allocation6 + $0x18] sm:$0xff]
    %v201 = vld [vmem:[#allocation12] sm:$0x1]
    %v203 = vperm.slane %v201, 0
    %vm205 = vcmask 261120
    %v207 = vsel %vm205, %v196, 0
    %209 = vmatpush.msra.mxu0 0.0
    %210 = vmatpush.msra.mxu0 0.0
    %211 = vmatpush.msra.mxu0 0.0
    %212 = vmatpush.msra.mxu0 0.0
    %213 = vmatpush.msra.mxu0 0.0
    %214 = vmatpush.msra.mxu0 0.0
    %215 = vmatpush.msra.mxu0 0.0
    %216 = vmatpush.msra.mxu0 0.0
    %217 = vmatpush.msra.mxu0 0.0
    %218 = vmatpush.msra.mxu0 0.0
    %219 = vmatpush.msra.mxu0 0.0
    %220 = vmatpush.msra.mxu0 0.0
    %221 = vmatpush.msra.mxu0 %v200
    %222 = vmatpush.msra.mxu0 %v199
    %223 = vmatpush.msra.mxu0 %v198
    %224 = vmatpush.msra.mxu0 %v197
    %225 = vmatmul.f32.gmra.mxu0 %v207
    %v226 = vpop.f32.mrf.mxu0
    %v227 = vadd.f32 %v203, %v226
    %228 = vdwg.mxu0
    %v229 = vmax.f32 %v227, 0.0
    %v230 = vld [vmem:[#allocation7] sm:$0xff]
    %v231 = vld [vmem:[#allocation7 + $0x8] sm:$0xff]
    %v232 = vld [vmem:[#allocation7 + $0x10] sm:$0xff]
    %v233 = vld [vmem:[#allocation7 + $0x18] sm:$0xff]
    %v234 = vld [vmem:[#allocation13] sm:$0x1]
    %v236 = vperm.slane %v234, 0
    %v239 = vsel %vm205, %v229, 0
    %241 = vmatpush.msra.mxu0 0.0
    %242 = vmatpush.msra.mxu0 0.0
    %243 = vmatpush.msra.mxu0 0.0
    %244 = vmatpush.msra.mxu0 0.0
    %245 = vmatpush.msra.mxu0 0.0
    %246 = vmatpush.msra.mxu0 0.0
    %247 = vmatpush.msra.mxu0 0.0
    %248 = vmatpush.msra.mxu0 0.0
    %249 = vmatpush.msra.mxu0 0.0
    %250 = vmatpush.msra.mxu0 0.0
    %251 = vmatpush.msra.mxu0 0.0
    %252 = vmatpush.msra.mxu0 0.0
    %253 = vmatpush.msra.mxu0 %v233
    %254 = vmatpush.msra.mxu0 %v232
    %255 = vmatpush.msra.mxu0 %v231
    %256 = vmatpush.msra.mxu0 %v230
    %257 = vmatmul.f32.gmra.mxu0 %v239
    %v258 = vpop.f32.mrf.mxu0
    %v259 = vadd.f32 %v236, %v258
    %260 = vdwg.mxu0
    %v261 = vmax.f32 %v259, 0.0
    %v262 = vld [vmem:[#allocation9] sm:$0xff]
    %v263 = vld [vmem:[#allocation9 + $0x8] sm:$0xff]
    %v264 = vld [vmem:[#allocation9 + $0x10] sm:$0xff]
    %v265 = vld [vmem:[#allocation9 + $0x18] sm:$0xff]
    %v266 = vld [vmem:[#allocation9 + $0x20] sm:$0xff]
    %v267 = vld [vmem:[#allocation9 + $0x28] sm:$0xff]
    %v268 = vld [vmem:[#allocation9 + $0x30] sm:$0xff]
    %v269 = vld [vmem:[#allocation9 + $0x38] sm:$0xff]
    %v270 = vld [vmem:[#allocation15] sm:$0x3]
    %v272 = vperm.slane %v270, 0
    %v273 = vperm.slane %v270, 1
    %v277 = vsel %vm205, %v261, 0
    %279 = vmatpush.msra.mxu0 0.0
    %280 = vmatpush.msra.mxu0 0.0
    %281 = vmatpush.msra.mxu0 0.0
    %282 = vmatpush.msra.mxu0 0.0
    %283 = vmatpush.msra.mxu0 0.0
    %284 = vmatpush.msra.mxu0 0.0
    %285 = vmatpush.msra.mxu0 0.0
    %286 = vmatpush.msra.mxu0 0.0
    %287 = vmatpush.msra.mxu0 0.0
    %288 = vmatpush.msra.mxu0 0.0
    %289 = vmatpush.msra.mxu0 0.0
    %290 = vmatpush.msra.mxu0 0.0
    %291 = vmatpush.msra.mxu0 %v268
    %292 = vmatpush.msra.mxu0 %v266
    %293 = vmatpush.msra.mxu0 %v264
    %294 = vmatpush.msra.mxu0 %v262
    %295 = vmatmul.f32.gmra.mxu0 %v277
    %v296 = vpop.f32.mrf.mxu0
    %v297 = vadd.f32 %v272, %v296
    %298 = vdwg.mxu0
    %299 = vmatpush.msra.mxu0 0.0
    %300 = vmatpush.msra.mxu0 0.0
    %301 = vmatpush.msra.mxu0 0.0
    %302 = vmatpush.msra.mxu0 0.0
    %303 = vmatpush.msra.mxu0 0.0
    %304 = vmatpush.msra.mxu0 0.0
    %305 = vmatpush.msra.mxu0 0.0
    %306 = vmatpush.msra.mxu0 0.0
    %307 = vmatpush.msra.mxu0 0.0
    %308 = vmatpush.msra.mxu0 0.0
    %309 = vmatpush.msra.mxu0 0.0
    %310 = vmatpush.msra.mxu0 0.0
    %311 = vmatpush.msra.mxu0 %v269
    %312 = vmatpush.msra.mxu0 %v267
    %313 = vmatpush.msra.mxu0 %v265
    %314 = vmatpush.msra.mxu0 %v263
    %315 = vmatmul.f32.gmra.mxu0 %v277
    %v316 = vpop.f32.mrf.mxu0
    %v317 = vadd.f32 %v273, %v316
    %318 = vdwg.mxu0
    %v319 = vmax.f32 %v317, -20.0
    %v320 = vmin.f32 %v319, 2.0
    %v321 = vmul.f32 %v320, 1.442695
    %v322 = vpow.pop %v321
    %v323 = vld [vmem:[%s9] sm:$0xff]
    %v324 = vmul.f32 %v322, %v323
    %v325 = vadd.f32 %v297, %v324
    %v326 = vtanh.pop %v325
    %v327 = vmul.f32 %v323, -0.5
    %v328 = vmul.f32 %v327, %v323
    %v329 = vsub.f32 %v328, %v320
    %v330 = vsub.f32 %v329, 0.9189385
    %v331 = vmul.f32 %v326, %v326
    %v332 = vsub.f32 1.0, %v331
    %v333 = vadd.f32 %v332, 1e-07
    %v334 = vlog2.pop %v333
    %v335 = vmul.f32 %v334, 0.6931472
    %v336 = vsub.f32 %v330, %v335
    %vm337 = vcmask 64512
    %v338 = vsel %vm337, %v336, 0.0
    %339 = vadd.xlane.f32.xlu0 %v338
    %v340 = vpop.xlane.xlu0 %339
    %341 = vst.msk [vmem:[%s10] sm:$0xff] %vm337, %v326
    %vm342 = vcmask 72768
    %343 = vst.msk [vmem:[%s10] sm:$0xff] %vm342, %v340
    // Predicated region
    $region78: #{actor_forward.1} parent=1 // pred_check
      _
    $region79: #{actor_forward.1} parent=1 // pred_check_branch
      %345 = sbr.rel (0) target = $region81
    $region80: #{actor_forward.1} parent=1 // pred_region
      _
    $region81: #{actor_forward.1} parent=1 // pred_fallthru
      _
    // Predicated region
    $region82: #{actor_forward.1} parent=1 // pred_check
      _
    $region83: #{actor_forward.1} parent=1 // pred_check_branch
      %347 = sbr.rel (0) target = $region85
    $region84: #{actor_forward.1} parent=1 // pred_region
      _
    $region85: #{actor_forward.1} parent=1 // pred_fallthru
      _
    %348 = vsyncpa [#allocation3], 1
    %349 = vsyncpa [#allocation5], 1
    %350 = vsyncpa [#allocation8], 1
    %351 = vsyncpa [#allocation11], 1
    %352 = vsyncpa [#allocation14], 1

</llo_original>
